<compile_context>
chip_gen: v7x
topology: tpu7x:2x2x1
jax: 0.10.0
libtpu: 0.0.40
codegen_flags: <defaults>
</compile_context>

<pallas_src>
import jax
import jax.numpy as jnp
from jax.experimental import pallas as pl
from jax.experimental.pallas import tpu as pltpu

N_CHAN, BATCH, SEQ = 7, 2, 4
N = N_CHAN * BATCH            # 14 independent length-4 signals
FEAT = 64 * N_CHAN            # 448 = fc1.in_features
BN_EPS = 1e-5
OUT_ROWS, OUT_LANES = 8, 128  # lane/sublane-dense padded output tile

_VMEM = pl.BlockSpec(memory_space=pltpu.MemorySpace.VMEM)


# ---------------------------------------------------------------------------
# Fused kernel: conv1->bn1->relu->pool -> conv2->bn2->relu->pool
#               -> channel interleave -> fc1->relu->fc2->relu->fc3
# ---------------------------------------------------------------------------
def fused_net_kernel(x_ref, w1_ref, w2m_ref, c_ref, wfc1_ref, wfc2_ref,
                     out_ref, feat_scr, flat_scr):
    """Whole Net.forward in a single invocation (no grid, no pipeline).

    feat_scr : VMEM (N, 64)  — holds [p0 | p1] after conv1/pool, then reused
                               for the pooled conv2 features.
    flat_scr : VMEM (8, 448) — batch-major fc1 input slab (rows >= BATCH zero).
    """
    # Zero the fc1 input slab up front (rows >= BATCH stay zero / discarded).
    flat_scr[...] = jnp.zeros_like(flat_scr)

    # ---- packed per-channel constants (single (8,128) buffer) --------------
    s1   = c_ref[0:1, 0:32]     # bn1 scale
    t1   = c_ref[1:2, 0:32]     # bn1 shift (conv1 bias folded in)
    s2d  = c_ref[2:3, :]        # bn2 scale, duplicated [s2 | s2]
    t2d  = c_ref[3:4, :]        # bn2 shift (conv2 bias folded in), duplicated
    bfc1 = c_ref[4:5, 0:120]
    bfc2 = c_ref[5:6, 0:84]
    w3   = c_ref[6:7, 0:84]     # fc3 weight row
    bfc3 = c_ref[7:8, 0:1]

    # ---- conv1 (1->32, k=3, pad=1) + bn1 + relu + maxpool(2,2) -------------
    x = x_ref[...]              # (N, 4)
    w1 = w1_ref[...]            # (3, 32)

    def tap(j, k):              # outer product x[:, j] (x) w1[k] -> (N, 32)
        return x[:, j:j + 1] * w1[k:k + 1, :]

    h0 = tap(0, 1) + tap(1, 2)                     # left zero-pad
    h1 = tap(0, 0) + tap(1, 1) + tap(2, 2)
    h2 = tap(1, 0) + tap(2, 1) + tap(3, 2)
    h3 = tap(2, 0) + tap(3, 1)                     # right zero-pad

    def bn1_relu(h):
        return jnp.maximum(h * s1 + t1, 0.0)

    feat_scr[:, 0:32]  = jnp.maximum(bn1_relu(h0), bn1_relu(h1))   # pool pos 0
    feat_scr[:, 32:64] = jnp.maximum(bn1_relu(h2), bn1_relu(h3))   # pool pos 1

    # ---- conv2 (32->64, k=3, pad=1) as ONE MXU pass + bn2 + relu + pool ----
    # G[:, 0:64] = conv2 output position 0, G[:, 64:128] = position 1.
    G = jnp.dot(feat_scr[...], w2m_ref[...], preferred_element_type=jnp.float32)
    G = jnp.maximum(G * s2d + t2d, 0.0)
    feat_scr[...] = jnp.maximum(G[:, 0:64], G[:, 64:128])          # (N, 64)

    # ---- channel interleave: torch.cat(dim=2)+flatten == flat[b, o*7+c] ----
    # fc1's weight is pre-permuted, so the kernel only needs
    #   flat2[b, 64*c + o] = F[c*BATCH + b, o]   (static scatter, 7 stores).
    for c in range(N_CHAN):
        flat_scr[0:BATCH, 64 * c:64 * (c + 1)] = \
            feat_scr[BATCH * c:BATCH * (c + 1), :]

    # ---- fc1 -> relu -> (Dropout = identity in eval) -> fc2 -> relu --------
    z = jnp.dot(flat_scr[...], wfc1_ref[...],
                preferred_element_type=jnp.float32) + bfc1          # (8, 120)
    z = jnp.maximum(z, 0.0)
    z = jnp.dot(z, wfc2_ref[...],
                preferred_element_type=jnp.float32) + bfc2          # (8, 84)
    z = jnp.maximum(z, 0.0)

    # ---- fc3 (84 -> 1): VPU multiply + cross-lane sum (no 1-col matmul) ----
    logit = jnp.sum(z * w3, axis=1, keepdims=True) + bfc3           # (8, 1)
    out_ref[...] = jnp.broadcast_to(logit, (OUT_ROWS, OUT_LANES))


# ---------------------------------------------------------------------------
# Parameter init (deterministic, synthetic) — shapes follow Net.__init__.
# ---------------------------------------------------------------------------
def init_params(key):
    ks = jax.random.split(key, 18)
    p = {}
    p["w1"] = 0.3 * jax.random.normal(ks[0], (32, 1, 3), jnp.float32)
    p["b1"] = 0.1 * jax.random.normal(ks[1], (32,), jnp.float32)
    p["bn1_gamma"] = 1.0 + 0.1 * jax.random.normal(ks[2], (32,), jnp.float32)
    p["bn1_beta"] = 0.1 * jax.random.normal(ks[3], (32,), jnp.float32)
    p["bn1_mean"] = 0.1 * jax.random.normal(ks[4], (32,), jnp.float32)
    p["bn1_var"] = jax.random.uniform(ks[5], (32,), jnp.float32, 0.5, 1.5)
    p["w2"] = 0.1 * jax.random.normal(ks[6], (64, 32, 3), jnp.float32)
    p["b2"] = 0.1 * jax.random.normal(ks[7], (64,), jnp.float32)
    p["bn2_gamma"] = 1.0 + 0.1 * jax.random.normal(ks[8], (64,), jnp.float32)
    p["bn2_beta"] = 0.1 * jax.random.normal(ks[9], (64,), jnp.float32)
    p["bn2_mean"] = 0.1 * jax.random.normal(ks[10], (64,), jnp.float32)
    p["bn2_var"] = jax.random.uniform(ks[11], (64,), jnp.float32, 0.5, 1.5)
    p["wfc1"] = 0.05 * jax.random.normal(ks[12], (120, 448), jnp.float32)
    p["bfc1"] = 0.05 * jax.random.normal(ks[13], (120,), jnp.float32)
    p["wfc2"] = 0.05 * jax.random.normal(ks[14], (84, 120), jnp.float32)
    p["bfc2"] = 0.05 * jax.random.normal(ks[15], (84,), jnp.float32)
    p["wfc3"] = 0.05 * jax.random.normal(ks[16], (1, 84), jnp.float32)
    p["bfc3"] = 0.05 * jax.random.normal(ks[17], (1,), jnp.float32)
    return p


# ---------------------------------------------------------------------------
# One-time parameter preprocessing (hoisted out of the jitted forward).
# ---------------------------------------------------------------------------
def prepare_params(p):
    # Fold BatchNorm running stats AND conv biases into scale/shift.
    s1 = p["bn1_gamma"] / jnp.sqrt(p["bn1_var"] + BN_EPS)
    t1 = p["bn1_beta"] - p["bn1_mean"] * s1 + p["b1"] * s1
    s2 = p["bn2_gamma"] / jnp.sqrt(p["bn2_var"] + BN_EPS)
    t2 = p["bn2_beta"] - p["bn2_mean"] * s2 + p["b2"] * s2

    w1t = p["w1"][:, 0, :].T                                  # (3, 32)
    w2t = jnp.transpose(p["w2"], (2, 1, 0))                   # (3, 32, 64)
    # Merged conv2 weight: [p0|p1] @ w2m -> [conv2_pos0 | conv2_pos1]
    #   pos0 = p0 @ W[:,:,1].T + p1 @ W[:,:,2].T
    #   pos1 = p0 @ W[:,:,0].T + p1 @ W[:,:,1].T
    w2m = jnp.block([[w2t[1], w2t[0]],
                     [w2t[2], w2t[1]]])                       # (64, 128)

    consts = jnp.zeros((8, 128), jnp.float32)
    consts = consts.at[0, 0:32].set(s1)
    consts = consts.at[1, 0:32].set(t1)
    consts = consts.at[2, :].set(jnp.concatenate([s2, s2]))
    consts = consts.at[3, :].set(jnp.concatenate([t2, t2]))
    consts = consts.at[4, 0:120].set(p["bfc1"])
    consts = consts.at[5, 0:84].set(p["bfc2"])
    consts = consts.at[6, 0:84].set(p["wfc3"][0])
    consts = consts.at[7, 0].set(p["bfc3"][0])

    # fc1 weight permuted to match the in-kernel layout flat2[b, 64*c + o]
    #   wfc1p[64*c + o, h] = Wfc1[h, o*7 + c]
    wfc1p = p["wfc1"].reshape(120, 64, N_CHAN).transpose(2, 1, 0).reshape(FEAT, 120)
    wfc2t = p["wfc2"].T                                       # (120, 84)

    return {"w1t": w1t, "w2m": w2m, "consts": consts,
            "wfc1p": wfc1p, "wfc2t": wfc2t}


@jax.jit
def net_forward(x, pp):
    """x: (n_channels=7, batch=2, seq=4) -> (batch,) logits."""
    x2 = x.reshape(N, SEQ)      # row n = channel*BATCH + batch (free reshape)
    args = (x2, pp["w1t"], pp["w2m"], pp["consts"], pp["wfc1p"], pp["wfc2t"])
    out = pl.pallas_call(
        fused_net_kernel,
        in_specs=[_VMEM] * len(args),
        out_specs=_VMEM,
        out_shape=jax.ShapeDtypeStruct((OUT_ROWS, OUT_LANES), jnp.float32),
        scratch_shapes=[pltpu.VMEM((N, 64), jnp.float32),
                        pltpu.VMEM((OUT_ROWS, FEAT), jnp.float32)],
    )(*args)
    return out[:BATCH, 0]       # .squeeze(-1) -> (batch,)


# ---------------------------------------------------------------------------
# Pure-JAX reference (mirrors the PyTorch forward, eval mode) for validation.
# ---------------------------------------------------------------------------
def reference_forward(x, p):
    def conv1d(inp, w, b):  # NCH / OIH, stride 1, pad 1
        out = jax.lax.conv_general_dilated(inp, w, (1,), ((1, 1),),
                                           dimension_numbers=("NCH", "OIH", "NCH"))
        return out + b.reshape(1, -1, 1)

    def bn(h, g, bt, m, v):
        return ((h - m.reshape(1, -1, 1)) / jnp.sqrt(v.reshape(1, -1, 1) + BN_EPS)
                * g.reshape(1, -1, 1) + bt.reshape(1, -1, 1))

    def pool(h):
        B, C, L = h.shape
        return h.reshape(B, C, L // 2, 2).max(axis=-1)

    outs = []
    for c in range(x.shape[0]):
        h = x[c][:, None, :]
        h = jax.nn.relu(bn(conv1d(h, p["w1"], p["b1"]),
                           p["bn1_gamma"], p["bn1_beta"], p["bn1_mean"], p["bn1_var"]))
        h = pool(h)
        h = jax.nn.relu(bn(conv1d(h, p["w2"], p["b2"]),
                           p["bn2_gamma"], p["bn2_beta"], p["bn2_mean"], p["bn2_var"]))
        h = pool(h)
        outs.append(h)
    h = jnp.concatenate(outs, axis=2)            # (B, 64, 7)
    h = h.reshape(h.shape[0], -1)                # (B, 448)
    h = jax.nn.relu(h @ p["wfc1"].T + p["bfc1"])
    h = jax.nn.relu(h @ p["wfc2"].T + p["bfc2"])
    h = h @ p["wfc3"].T + p["bfc3"]
    return h[:, 0]


if __name__ == "__main__":
    key = jax.random.PRNGKey(0)
    pkey, xkey = jax.random.split(key)
    params = init_params(pkey)
    x = jax.random.normal(xkey, (N_CHAN, BATCH, SEQ), jnp.float32)

    prepped = prepare_params(params)             # one-time param prep
    out = net_forward(x, prepped)
    jax.block_until_ready(out)
    assert out.shape == (BATCH,), out.shape

    ref = reference_forward(x, params)
    assert jnp.allclose(out, ref, atol=1e-4, rtol=1e-4), (out, ref)

    print("KERNEL_OK")
</pallas_src>

<mosaic_0001>
module attributes {stable_mosaic.version = 11 : i64} {
  func.func @fused_net_kernel(%arg0: memref<14x4xf32, #tpu.memory_space<vmem>>, %arg1: memref<3x32xf32, #tpu.memory_space<vmem>>, %arg2: memref<64x128xf32, #tpu.memory_space<vmem>>, %arg3: memref<8x128xf32, #tpu.memory_space<vmem>>, %arg4: memref<448x120xf32, #tpu.memory_space<vmem>>, %arg5: memref<120x84xf32, #tpu.memory_space<vmem>>, %arg6: memref<8x128xf32, #tpu.memory_space<vmem>>, %arg7: memref<14x64xf32, #tpu.memory_space<vmem>>, %arg8: memref<8x448xf32, #tpu.memory_space<vmem>>) attributes {dimension_semantics = [], scalar_prefetch = 0 : i64, scratch_operands = 2 : i64, tpu.core_type = #tpu.core_type<tc>} {
    %cst = arith.constant 0.000000e+00 : f32
    %0 = vector.broadcast %cst : f32 to vector<8x448xf32>
    %c0 = arith.constant 0 : index
    %c0_0 = arith.constant 0 : index
    %1 = vector.load %arg8[%c0, %c0_0] : memref<8x448xf32, #tpu.memory_space<vmem>>, vector<8x448xf32>
    tpu.vector_store %arg8[%c0, %c0_0], %0 {strides = array<i32>} : memref<8x448xf32, #tpu.memory_space<vmem>>, vector<8x448xf32>,
    %c0_1 = arith.constant 0 : index
    %c0_2 = arith.constant 0 : index
    %2 = vector.load %arg3[%c0_1, %c0_2] : memref<8x128xf32, #tpu.memory_space<vmem>>, vector<1x32xf32>
    %c1 = arith.constant 1 : index
    %c0_3 = arith.constant 0 : index
    %3 = vector.load %arg3[%c1, %c0_3] : memref<8x128xf32, #tpu.memory_space<vmem>>, vector<1x32xf32>
    %c2 = arith.constant 2 : index
    %c0_4 = arith.constant 0 : index
    %4 = vector.load %arg3[%c2, %c0_4] : memref<8x128xf32, #tpu.memory_space<vmem>>, vector<1x128xf32>
    %c3 = arith.constant 3 : index
    %c0_5 = arith.constant 0 : index
    %5 = vector.load %arg3[%c3, %c0_5] : memref<8x128xf32, #tpu.memory_space<vmem>>, vector<1x128xf32>
    %c4 = arith.constant 4 : index
    %c0_6 = arith.constant 0 : index
    %6 = vector.load %arg3[%c4, %c0_6] : memref<8x128xf32, #tpu.memory_space<vmem>>, vector<1x120xf32>
    %c5 = arith.constant 5 : index
    %c0_7 = arith.constant 0 : index
    %7 = vector.load %arg3[%c5, %c0_7] : memref<8x128xf32, #tpu.memory_space<vmem>>, vector<1x84xf32>
    %c6 = arith.constant 6 : index
    %c0_8 = arith.constant 0 : index
    %8 = vector.load %arg3[%c6, %c0_8] : memref<8x128xf32, #tpu.memory_space<vmem>>, vector<1x84xf32>
    %c7 = arith.constant 7 : index
    %c0_9 = arith.constant 0 : index
    %9 = vector.load %arg3[%c7, %c0_9] : memref<8x128xf32, #tpu.memory_space<vmem>>, vector<1x1xf32>
    %c0_10 = arith.constant 0 : index
    %c0_11 = arith.constant 0 : index
    %10 = vector.load %arg0[%c0_10, %c0_11] : memref<14x4xf32, #tpu.memory_space<vmem>>, vector<14x4xf32>
    %c0_12 = arith.constant 0 : index
    %c0_13 = arith.constant 0 : index
    %11 = vector.load %arg1[%c0_12, %c0_13] : memref<3x32xf32, #tpu.memory_space<vmem>>, vector<3x32xf32>
    %12 = vector.extract_strided_slice %10 {offsets = [0, 0], sizes = [14, 1], strides = [1, 1]} : vector<14x4xf32> to vector<14x1xf32>
    %13 = vector.extract_strided_slice %11 {offsets = [1, 0], sizes = [1, 32], strides = [1, 1]} : vector<3x32xf32> to vector<1x32xf32>
    %14 = vector.broadcast %12 : vector<14x1xf32> to vector<14x32xf32>
    %15 = vector.broadcast %13 : vector<1x32xf32> to vector<14x32xf32>
    %16 = arith.mulf %14, %15 : vector<14x32xf32>
    %17 = vector.extract_strided_slice %10 {offsets = [0, 1], sizes = [14, 1], strides = [1, 1]} : vector<14x4xf32> to vector<14x1xf32>
    %18 = vector.extract_strided_slice %11 {offsets = [2, 0], sizes = [1, 32], strides = [1, 1]} : vector<3x32xf32> to vector<1x32xf32>
    %19 = vector.broadcast %17 : vector<14x1xf32> to vector<14x32xf32>
    %20 = vector.broadcast %18 : vector<1x32xf32> to vector<14x32xf32>
    %21 = arith.mulf %19, %20 : vector<14x32xf32>
    %22 = arith.addf %16, %21 : vector<14x32xf32>
    %23 = vector.extract_strided_slice %10 {offsets = [0, 0], sizes = [14, 1], strides = [1, 1]} : vector<14x4xf32> to vector<14x1xf32>
    %24 = vector.extract_strided_slice %11 {offsets = [0, 0], sizes = [1, 32], strides = [1, 1]} : vector<3x32xf32> to vector<1x32xf32>
    %25 = vector.broadcast %23 : vector<14x1xf32> to vector<14x32xf32>
    %26 = vector.broadcast %24 : vector<1x32xf32> to vector<14x32xf32>
    %27 = arith.mulf %25, %26 : vector<14x32xf32>
    %28 = vector.extract_strided_slice %10 {offsets = [0, 1], sizes = [14, 1], strides = [1, 1]} : vector<14x4xf32> to vector<14x1xf32>
    %29 = vector.extract_strided_slice %11 {offsets = [1, 0], sizes = [1, 32], strides = [1, 1]} : vector<3x32xf32> to vector<1x32xf32>
    %30 = vector.broadcast %28 : vector<14x1xf32> to vector<14x32xf32>
    %31 = vector.broadcast %29 : vector<1x32xf32> to vector<14x32xf32>
    %32 = arith.mulf %30, %31 : vector<14x32xf32>
    %33 = arith.addf %27, %32 : vector<14x32xf32>
    %34 = vector.extract_strided_slice %10 {offsets = [0, 2], sizes = [14, 1], strides = [1, 1]} : vector<14x4xf32> to vector<14x1xf32>
    %35 = vector.extract_strided_slice %11 {offsets = [2, 0], sizes = [1, 32], strides = [1, 1]} : vector<3x32xf32> to vector<1x32xf32>
    %36 = vector.broadcast %34 : vector<14x1xf32> to vector<14x32xf32>
    %37 = vector.broadcast %35 : vector<1x32xf32> to vector<14x32xf32>
    %38 = arith.mulf %36, %37 : vector<14x32xf32>
    %39 = arith.addf %33, %38 : vector<14x32xf32>
    %40 = vector.extract_strided_slice %10 {offsets = [0, 1], sizes = [14, 1], strides = [1, 1]} : vector<14x4xf32> to vector<14x1xf32>
    %41 = vector.extract_strided_slice %11 {offsets = [0, 0], sizes = [1, 32], strides = [1, 1]} : vector<3x32xf32> to vector<1x32xf32>
    %42 = vector.broadcast %40 : vector<14x1xf32> to vector<14x32xf32>
    %43 = vector.broadcast %41 : vector<1x32xf32> to vector<14x32xf32>
    %44 = arith.mulf %42, %43 : vector<14x32xf32>
    %45 = vector.extract_strided_slice %10 {offsets = [0, 2], sizes = [14, 1], strides = [1, 1]} : vector<14x4xf32> to vector<14x1xf32>
    %46 = vector.extract_strided_slice %11 {offsets = [1, 0], sizes = [1, 32], strides = [1, 1]} : vector<3x32xf32> to vector<1x32xf32>
    %47 = vector.broadcast %45 : vector<14x1xf32> to vector<14x32xf32>
    %48 = vector.broadcast %46 : vector<1x32xf32> to vector<14x32xf32>
    %49 = arith.mulf %47, %48 : vector<14x32xf32>
    %50 = arith.addf %44, %49 : vector<14x32xf32>
    %51 = vector.extract_strided_slice %10 {offsets = [0, 3], sizes = [14, 1], strides = [1, 1]} : vector<14x4xf32> to vector<14x1xf32>
    %52 = vector.extract_strided_slice %11 {offsets = [2, 0], sizes = [1, 32], strides = [1, 1]} : vector<3x32xf32> to vector<1x32xf32>
    %53 = vector.broadcast %51 : vector<14x1xf32> to vector<14x32xf32>
    %54 = vector.broadcast %52 : vector<1x32xf32> to vector<14x32xf32>
    %55 = arith.mulf %53, %54 : vector<14x32xf32>
    %56 = arith.addf %50, %55 : vector<14x32xf32>
    %57 = vector.extract_strided_slice %10 {offsets = [0, 2], sizes = [14, 1], strides = [1, 1]} : vector<14x4xf32> to vector<14x1xf32>
    %58 = vector.extract_strided_slice %11 {offsets = [0, 0], sizes = [1, 32], strides = [1, 1]} : vector<3x32xf32> to vector<1x32xf32>
    %59 = vector.broadcast %57 : vector<14x1xf32> to vector<14x32xf32>
    %60 = vector.broadcast %58 : vector<1x32xf32> to vector<14x32xf32>
    %61 = arith.mulf %59, %60 : vector<14x32xf32>
    %62 = vector.extract_strided_slice %10 {offsets = [0, 3], sizes = [14, 1], strides = [1, 1]} : vector<14x4xf32> to vector<14x1xf32>
    %63 = vector.extract_strided_slice %11 {offsets = [1, 0], sizes = [1, 32], strides = [1, 1]} : vector<3x32xf32> to vector<1x32xf32>
    %64 = vector.broadcast %62 : vector<14x1xf32> to vector<14x32xf32>
    %65 = vector.broadcast %63 : vector<1x32xf32> to vector<14x32xf32>
    %66 = arith.mulf %64, %65 : vector<14x32xf32>
    %67 = arith.addf %61, %66 : vector<14x32xf32>
    %68 = vector.broadcast %2 : vector<1x32xf32> to vector<14x32xf32>
    %69 = arith.mulf %22, %68 : vector<14x32xf32>
    %70 = vector.broadcast %3 : vector<1x32xf32> to vector<14x32xf32>
    %71 = arith.addf %69, %70 : vector<14x32xf32>
    %cst_14 = arith.constant 0.000000e+00 : f32
    %72 = vector.broadcast %cst_14 : f32 to vector<14x32xf32>
    %73 = arith.maximumf %71, %72 : vector<14x32xf32>
    %74 = vector.broadcast %2 : vector<1x32xf32> to vector<14x32xf32>
    %75 = arith.mulf %39, %74 : vector<14x32xf32>
    %76 = vector.broadcast %3 : vector<1x32xf32> to vector<14x32xf32>
    %77 = arith.addf %75, %76 : vector<14x32xf32>
    %cst_15 = arith.constant 0.000000e+00 : f32
    %78 = vector.broadcast %cst_15 : f32 to vector<14x32xf32>
    %79 = arith.maximumf %77, %78 : vector<14x32xf32>
    %80 = arith.maximumf %73, %79 : vector<14x32xf32>
    %c0_16 = arith.constant 0 : index
    %c0_17 = arith.constant 0 : index
    %81 = vector.load %arg7[%c0_16, %c0_17] : memref<14x64xf32, #tpu.memory_space<vmem>>, vector<14x32xf32>
    tpu.vector_store %arg7[%c0_16, %c0_17], %80 {strides = array<i32>} : memref<14x64xf32, #tpu.memory_space<vmem>>, vector<14x32xf32>,
    %82 = vector.broadcast %2 : vector<1x32xf32> to vector<14x32xf32>
    %83 = arith.mulf %56, %82 : vector<14x32xf32>
    %84 = vector.broadcast %3 : vector<1x32xf32> to vector<14x32xf32>
    %85 = arith.addf %83, %84 : vector<14x32xf32>
    %cst_18 = arith.constant 0.000000e+00 : f32
    %86 = vector.broadcast %cst_18 : f32 to vector<14x32xf32>
    %87 = arith.maximumf %85, %86 : vector<14x32xf32>
    %88 = vector.broadcast %2 : vector<1x32xf32> to vector<14x32xf32>
    %89 = arith.mulf %67, %88 : vector<14x32xf32>
    %90 = vector.broadcast %3 : vector<1x32xf32> to vector<14x32xf32>
    %91 = arith.addf %89, %90 : vector<14x32xf32>
    %cst_19 = arith.constant 0.000000e+00 : f32
    %92 = vector.broadcast %cst_19 : f32 to vector<14x32xf32>
    %93 = arith.maximumf %91, %92 : vector<14x32xf32>
    %94 = arith.maximumf %87, %93 : vector<14x32xf32>
    %c0_20 = arith.constant 0 : index
    %c32 = arith.constant 32 : index
    %95 = vector.load %arg7[%c0_20, %c32] : memref<14x64xf32, #tpu.memory_space<vmem>>, vector<14x32xf32>
    tpu.vector_store %arg7[%c0_20, %c32], %94 {strides = array<i32>} : memref<14x64xf32, #tpu.memory_space<vmem>>, vector<14x32xf32>,
    %c0_21 = arith.constant 0 : index
    %c0_22 = arith.constant 0 : index
    %96 = vector.load %arg7[%c0_21, %c0_22] : memref<14x64xf32, #tpu.memory_space<vmem>>, vector<14x64xf32>
    %c0_23 = arith.constant 0 : index
    %c0_24 = arith.constant 0 : index
    %97 = vector.load %arg2[%c0_23, %c0_24] : memref<64x128xf32, #tpu.memory_space<vmem>>, vector<64x128xf32>
    %cst_25 = arith.constant dense<0.000000e+00> : vector<14x128xf32>
    %98 = tpu.matmul %96, %97, %cst_25 {dimension_numbers = #tpu.dot_dimension_numbers<[1], [0], [0], [1], [0, 0, 1, 1], [], []>} : vector<14x64xf32>, vector<64x128xf32>, vector<14x128xf32> -> vector<14x128xf32>
    %99 = vector.broadcast %4 : vector<1x128xf32> to vector<14x128xf32>
    %100 = arith.mulf %98, %99 : vector<14x128xf32>
    %101 = vector.broadcast %5 : vector<1x128xf32> to vector<14x128xf32>
    %102 = arith.addf %100, %101 : vector<14x128xf32>
    %cst_26 = arith.constant 0.000000e+00 : f32
    %103 = vector.broadcast %cst_26 : f32 to vector<14x128xf32>
    %104 = arith.maximumf %102, %103 : vector<14x128xf32>
    %105 = vector.extract_strided_slice %104 {offsets = [0, 0], sizes = [14, 64], strides = [1, 1]} : vector<14x128xf32> to vector<14x64xf32>
    %106 = vector.extract_strided_slice %104 {offsets = [0, 64], sizes = [14, 64], strides = [1, 1]} : vector<14x128xf32> to vector<14x64xf32>
    %107 = arith.maximumf %105, %106 : vector<14x64xf32>
    %c0_27 = arith.constant 0 : index
    %c0_28 = arith.constant 0 : index
    %108 = vector.load %arg7[%c0_27, %c0_28] : memref<14x64xf32, #tpu.memory_space<vmem>>, vector<14x64xf32>
    tpu.vector_store %arg7[%c0_27, %c0_28], %107 {strides = array<i32>} : memref<14x64xf32, #tpu.memory_space<vmem>>, vector<14x64xf32>,
    %c0_29 = arith.constant 0 : index
    %c0_30 = arith.constant 0 : index
    %109 = vector.load %arg7[%c0_29, %c0_30] : memref<14x64xf32, #tpu.memory_space<vmem>>, vector<2x64xf32>
    %c0_31 = arith.constant 0 : index
    %c0_32 = arith.constant 0 : index
    %110 = vector.load %arg8[%c0_31, %c0_32] : memref<8x448xf32, #tpu.memory_space<vmem>>, vector<2x64xf32>
    tpu.vector_store %arg8[%c0_31, %c0_32], %109 {strides = array<i32>} : memref<8x448xf32, #tpu.memory_space<vmem>>, vector<2x64xf32>,
    %c2_33 = arith.constant 2 : index
    %c0_34 = arith.constant 0 : index
    %111 = vector.load %arg7[%c2_33, %c0_34] : memref<14x64xf32, #tpu.memory_space<vmem>>, vector<2x64xf32>
    %c0_35 = arith.constant 0 : index
    %c64 = arith.constant 64 : index
    %112 = vector.load %arg8[%c0_35, %c64] : memref<8x448xf32, #tpu.memory_space<vmem>>, vector<2x64xf32>
    tpu.vector_store %arg8[%c0_35, %c64], %111 {strides = array<i32>} : memref<8x448xf32, #tpu.memory_space<vmem>>, vector<2x64xf32>,
    %c4_36 = arith.constant 4 : index
    %c0_37 = arith.constant 0 : index
    %113 = vector.load %arg7[%c4_36, %c0_37] : memref<14x64xf32, #tpu.memory_space<vmem>>, vector<2x64xf32>
    %c0_38 = arith.constant 0 : index
    %c128 = arith.constant 128 : index
    %114 = vector.load %arg8[%c0_38, %c128] : memref<8x448xf32, #tpu.memory_space<vmem>>, vector<2x64xf32>
    tpu.vector_store %arg8[%c0_38, %c128], %113 {strides = array<i32>} : memref<8x448xf32, #tpu.memory_space<vmem>>, vector<2x64xf32>,
    %c6_39 = arith.constant 6 : index
    %c0_40 = arith.constant 0 : index
    %115 = vector.load %arg7[%c6_39, %c0_40] : memref<14x64xf32, #tpu.memory_space<vmem>>, vector<2x64xf32>
    %c0_41 = arith.constant 0 : index
    %c192 = arith.constant 192 : index
    %116 = vector.load %arg8[%c0_41, %c192] : memref<8x448xf32, #tpu.memory_space<vmem>>, vector<2x64xf32>
    tpu.vector_store %arg8[%c0_41, %c192], %115 {strides = array<i32>} : memref<8x448xf32, #tpu.memory_space<vmem>>, vector<2x64xf32>,
    %c8 = arith.constant 8 : index
    %c0_42 = arith.constant 0 : index
    %117 = vector.load %arg7[%c8, %c0_42] : memref<14x64xf32, #tpu.memory_space<vmem>>, vector<2x64xf32>
    %c0_43 = arith.constant 0 : index
    %c256 = arith.constant 256 : index
    %118 = vector.load %arg8[%c0_43, %c256] : memref<8x448xf32, #tpu.memory_space<vmem>>, vector<2x64xf32>
    tpu.vector_store %arg8[%c0_43, %c256], %117 {strides = array<i32>} : memref<8x448xf32, #tpu.memory_space<vmem>>, vector<2x64xf32>,
    %c10 = arith.constant 10 : index
    %c0_44 = arith.constant 0 : index
    %119 = vector.load %arg7[%c10, %c0_44] : memref<14x64xf32, #tpu.memory_space<vmem>>, vector<2x64xf32>
    %c0_45 = arith.constant 0 : index
    %c320 = arith.constant 320 : index
    %120 = vector.load %arg8[%c0_45, %c320] : memref<8x448xf32, #tpu.memory_space<vmem>>, vector<2x64xf32>
    tpu.vector_store %arg8[%c0_45, %c320], %119 {strides = array<i32>} : memref<8x448xf32, #tpu.memory_space<vmem>>, vector<2x64xf32>,
    %c12 = arith.constant 12 : index
    %c0_46 = arith.constant 0 : index
    %121 = vector.load %arg7[%c12, %c0_46] : memref<14x64xf32, #tpu.memory_space<vmem>>, vector<2x64xf32>
    %c0_47 = arith.constant 0 : index
    %c384 = arith.constant 384 : index
    %122 = vector.load %arg8[%c0_47, %c384] : memref<8x448xf32, #tpu.memory_space<vmem>>, vector<2x64xf32>
    tpu.vector_store %arg8[%c0_47, %c384], %121 {strides = array<i32>} : memref<8x448xf32, #tpu.memory_space<vmem>>, vector<2x64xf32>,
    %c0_48 = arith.constant 0 : index
    %c0_49 = arith.constant 0 : index
    %123 = vector.load %arg8[%c0_48, %c0_49] : memref<8x448xf32, #tpu.memory_space<vmem>>, vector<8x448xf32>
    %c0_50 = arith.constant 0 : index
    %c0_51 = arith.constant 0 : index
    %124 = vector.load %arg4[%c0_50, %c0_51] : memref<448x120xf32, #tpu.memory_space<vmem>>, vector<448x120xf32>
    %cst_52 = arith.constant dense<0.000000e+00> : vector<8x120xf32>
    %125 = tpu.matmul %123, %124, %cst_52 {dimension_numbers = #tpu.dot_dimension_numbers<[1], [0], [0], [1], [0, 0, 1, 1], [], []>} : vector<8x448xf32>, vector<448x120xf32>, vector<8x120xf32> -> vector<8x120xf32>
    %126 = vector.broadcast %6 : vector<1x120xf32> to vector<8x120xf32>
    %127 = arith.addf %125, %126 : vector<8x120xf32>
    %cst_53 = arith.constant 0.000000e+00 : f32
    %128 = vector.broadcast %cst_53 : f32 to vector<8x120xf32>
    %129 = arith.maximumf %127, %128 : vector<8x120xf32>
    %c0_54 = arith.constant 0 : index
    %c0_55 = arith.constant 0 : index
    %130 = vector.load %arg5[%c0_54, %c0_55] : memref<120x84xf32, #tpu.memory_space<vmem>>, vector<120x84xf32>
    %cst_56 = arith.constant dense<0.000000e+00> : vector<8x84xf32>
    %131 = tpu.matmul %129, %130, %cst_56 {dimension_numbers = #tpu.dot_dimension_numbers<[1], [0], [0], [1], [0, 0, 1, 1], [], []>} : vector<8x120xf32>, vector<120x84xf32>, vector<8x84xf32> -> vector<8x84xf32>
    %132 = vector.broadcast %7 : vector<1x84xf32> to vector<8x84xf32>
    %133 = arith.addf %131, %132 : vector<8x84xf32>
    %cst_57 = arith.constant 0.000000e+00 : f32
    %134 = vector.broadcast %cst_57 : f32 to vector<8x84xf32>
    %135 = arith.maximumf %133, %134 : vector<8x84xf32>
    %136 = vector.broadcast %8 : vector<1x84xf32> to vector<8x84xf32>
    %137 = arith.mulf %135, %136 : vector<8x84xf32>
    %cst_58 = arith.constant dense<0.000000e+00> : vector<8xf32>
    %138 = vector.multi_reduction <add>, %137, %cst_58 [1] : vector<8x84xf32> to vector<8xf32>
    %139 = vector.shape_cast %138 : vector<8xf32> to vector<8x1xf32>
    %140 = vector.broadcast %9 : vector<1x1xf32> to vector<8x1xf32>
    %141 = arith.addf %139, %140 : vector<8x1xf32>
    %142 = vector.shape_cast %141 : vector<8x1xf32> to vector<8x1xf32>
    %143 = vector.broadcast %142 : vector<8x1xf32> to vector<8x128xf32>
    %c0_59 = arith.constant 0 : index
    %c0_60 = arith.constant 0 : index
    %144 = vector.load %arg6[%c0_59, %c0_60] : memref<8x128xf32, #tpu.memory_space<vmem>>, vector<8x128xf32>
    tpu.vector_store %arg6[%c0_59, %c0_60], %143 {strides = array<i32>} : memref<8x128xf32, #tpu.memory_space<vmem>>, vector<8x128xf32>,
    return
  }
}

</mosaic_0001>

<llo_original>
// kernel: net_forward.1
$region0: #{net_forward.1}
  #allocation0 [shape = 'u32[]', space=smem, size = 0x4, offset = 0x4, fixed_abs, tag = 'smem constant byte address 0x4 - core index']
  #allocation1 [shape = 'u32[144,128]{1,0:T(1,128)}', space=vmem, size = 0x12000, scoped, tag = 'internal scratch']
  #allocation2 [shape = 'f32[14,64]{1,0:T(8,128)}', space=vmem, size = 0x2000, scoped, tag = 'scratch operand']
  #allocation3 [shape = 'f32[8,448]{1,0:T(8,128)}', space=vmem, size = 0x4000, scoped, tag = 'scratch operand']
  %s0 = inlined_call_operand.vmem [shape: f32[14,4], index: 0, kind: input, shape index: {}]
  %s1 = inlined_call_operand.vmem [shape: f32[3,32], index: 1, kind: input, shape index: {}]
  %s2 = inlined_call_operand.vmem [shape: f32[64,128], index: 2, kind: input, shape index: {}]
  %s3 = inlined_call_operand.vmem [shape: f32[8,128], index: 3, kind: input, shape index: {}]
  %s4 = inlined_call_operand.hbm [shape: f32[448,120], index: 4, kind: input, shape index: {}]
  %s5 = inlined_call_operand.vmem [shape: f32[120,84], index: 5, kind: input, shape index: {}]
  %s6 = inlined_call_operand.vmem [shape: f32[8,128], index: 6, kind: output, shape index: {}]
  %s7 = sld [smem:[#allocation0]]
  $region38: #{net_forward.1} parent=0
    _
  %s9 = ssub.s32 1, %s7
  %s10 = scalar_select 0, %s9, %s7
  $region1: #{net_forward.1} parent=0
    #allocation4 [shape = 'u8[229376]{0}', space=vmem, size = 0x38000, scoped, tag = 'input window, operand 4, single buffered']
    #allocation5 [shape = 's32[1]{0}', space=sflag, size = 0x4, scoped, tag = 'scoped memory for net_forward.1']
    %11 = vsyncpa [#allocation5], 0
    // Predicated region
    $region2: #{net_forward.1} parent=1 // pred_check
      _
    $region3: #{net_forward.1} parent=1 // pred_check_branch
      %13 = sbr.rel (0) target = $region5
    $region4: #{net_forward.1} parent=1 // pred_region
      _
    $region5: #{net_forward.1} parent=1 // pred_fallthru
      _
    // Predicated region
    $region6: #{net_forward.1} parent=1 // pred_check
      _
    $region7: #{net_forward.1} parent=1 // pred_check_branch
      %15 = sbr.rel (0) target = $region9
    $region8: #{net_forward.1} parent=1 // pred_region
      _
    $region9: #{net_forward.1} parent=1 // pred_fallthru
      _
    // Predicated region
    $region10: #{net_forward.1} parent=1 // pred_check
      _
    $region11: #{net_forward.1} parent=1 // pred_check_branch
      %17 = sbr.rel (0) target = $region13
    $region12: #{net_forward.1} parent=1 // pred_region
      _
    $region13: #{net_forward.1} parent=1 // pred_fallthru
      _
    // Predicated region
    $region14: #{net_forward.1} parent=1 // pred_check
      _
    $region15: #{net_forward.1} parent=1 // pred_check_branch
      %19 = sbr.rel (0) target = $region17
    $region16: #{net_forward.1} parent=1 // pred_region
      _
    $region17: #{net_forward.1} parent=1 // pred_fallthru
      _
    // Predicated region
    $region18: #{net_forward.1} parent=1 // pred_check
      _
    $region19: #{net_forward.1} parent=1 // pred_check_branch
      %21 = sbr.rel (0) target = $region21
    $region20: #{net_forward.1} parent=1 // pred_region
      %s23 = ssub.s32 7168, 7168
      %24 = vsyncadd [#allocation5], %s23
      %s25 = sshll.u32 [#allocation4], 4
      %s26 = int_to_ptr.vmem [resolvable:$true] %s25
      %31 = dma.hbm_to_vmem [thread:$0]  %s4, 7168, %s26, [#allocation5], 128, 128, 8
    $region21: #{net_forward.1} parent=1 // pred_fallthru
      _
    // Predicated region
    $region22: #{net_forward.1} parent=1 // pred_check
      _
    $region23: #{net_forward.1} parent=1 // pred_check_branch
      %33 = sbr.rel (0) target = $region25
    $region24: #{net_forward.1} parent=1 // pred_region
      _
    $region25: #{net_forward.1} parent=1 // pred_fallthru
      _
    // Predicated region
    $region26: #{net_forward.1} parent=1 // pred_check
      _
    $region27: #{net_forward.1} parent=1 // pred_check_branch
      %35 = sbr.rel (0) target = $region29
    $region28: #{net_forward.1} parent=1 // pred_region
      %36 = dma.done [#allocation5], 7168
    $region29: #{net_forward.1} parent=1 // pred_fallthru
      _
    %37 = vst [vmem:[#allocation3] sm:$0xff] 0.0
    %38 = vst [vmem:[#allocation3 + $0x8] sm:$0xff] 0.0
    %39 = vst [vmem:[#allocation3 + $0x10] sm:$0xff] 0.0
    %vm40 = vcmask 523264
    %41 = vst.msk [vmem:[#allocation3 + $0x18] sm:$0xff] %vm40, 0.0
    %v42 = vld [vmem:[%s3] sm:$0x1]
    %v43 = vld [vmem:[%s3 + $0x1] sm:$0x1]
    %v44 = vld [vmem:[%s3 + $0x2] sm:$0x1]
    %v45 = vld [vmem:[%s3 + $0x3] sm:$0x1]
    %v46 = vld [vmem:[%s3 + $0x4] sm:$0x1]
    %v47 = vld [vmem:[%s3 + $0x5] sm:$0x1]
    %v48 = vld [vmem:[%s3 + $0x6] sm:$0x1]
    %v49 = vld [vmem:[%s3 + $0x7] sm:$0x1]
    %v50 = vld [vmem:[%s0] sm:$0xff]
    %v51 = vld [vmem:[%s0 + $0x8] sm:$0x3f]
    %v52 = vld [vmem:[%s1] sm:$0x7]
    %54 = vset.pattern.permute.xlu0 0
    %55 = vperm.xlu0 %54, %v50
    %v56 = vpop.permute.xlu0 %55
    %59 = vset.pattern.permute.xlu0 0
    %60 = vperm.xlu0 %59, %v51
    %v61 = vpop.permute.xlu0 %60
    %v63 = vlaneseq
    %v64 = vshrl.u32 %v63, 7
    %v65 = vsub.s32 1, %v64
    %v66 = vrot.slane %v52, %v65
    %v67 = vmul.f32 %v56, %v66
    %v68 = vmul.f32 %v61, %v66
    %69 = vset.pattern.permute.xlu0 1
    %70 = vperm.xlu0 %69, %v50
    %v71 = vpop.permute.xlu0 %70
    %73 = vset.pattern.permute.xlu0 1
    %74 = vperm.xlu0 %73, %v51
    %v75 = vpop.permute.xlu0 %74
    %v77 = vlaneseq
    %v78 = vshrl.u32 %v77, 7
    %v79 = vsub.s32 2, %v78
    %v80 = vrot.slane %v52, %v79
    %v81 = vmul.f32 %v71, %v80
    %v82 = vmul.f32 %v75, %v80
    %v83 = vadd.f32 %v67, %v81
    %v84 = vadd.f32 %v68, %v82
    %v85 = vlaneseq
    %v86 = vshrl.u32 %v85, 7
    %v87 = vsub.s32 0, %v86
    %v88 = vrot.slane %v52, %v87
    %v89 = vmul.f32 %v56, %v88
    %v90 = vmul.f32 %v61, %v88
    %v91 = vmul.f32 %v71, %v66
    %v92 = vmul.f32 %v75, %v66
    %v93 = vadd.f32 %v89, %v91
    %v94 = vadd.f32 %v90, %v92
    %95 = vset.pattern.permute.xlu0 2
    %96 = vperm.xlu0 %95, %v50
    %v97 = vpop.permute.xlu0 %96
    %99 = vset.pattern.permute.xlu0 2
    %100 = vperm.xlu0 %99, %v51
    %v101 = vpop.permute.xlu0 %100
    %v103 = vmul.f32 %v97, %v80
    %v104 = vmul.f32 %v101, %v80
    %v105 = vadd.f32 %v93, %v103
    %v106 = vadd.f32 %v94, %v104
    %v107 = vmul.f32 %v71, %v88
    %v108 = vmul.f32 %v75, %v88
    %v109 = vmul.f32 %v97, %v66
    %v110 = vmul.f32 %v101, %v66
    %v111 = vadd.f32 %v107, %v109
    %v112 = vadd.f32 %v108, %v110
    %113 = vset.pattern.permute.xlu0 3
    %114 = vperm.xlu0 %113, %v50
    %v115 = vpop.permute.xlu0 %114
    %117 = vset.pattern.permute.xlu0 3
    %118 = vperm.xlu0 %117, %v51
    %v119 = vpop.permute.xlu0 %118
    %v121 = vmul.f32 %v115, %v80
    %v122 = vmul.f32 %v119, %v80
    %v123 = vadd.f32 %v111, %v121
    %v124 = vadd.f32 %v112, %v122
    %v125 = vmul.f32 %v97, %v88
    %v126 = vmul.f32 %v101, %v88
    %v127 = vmul.f32 %v115, %v66
    %v128 = vmul.f32 %v119, %v66
    %v129 = vadd.f32 %v125, %v127
    %v130 = vadd.f32 %v126, %v128
    %v131 = vlaneseq
    %v132 = vshrl.u32 %v131, 7
    %v133 = vsub.s32 0, %v132
    %v134 = vrot.slane %v42, %v133
    %v135 = vmul.f32 %v83, %v134
    %v136 = vmul.f32 %v84, %v134
    %v137 = vlaneseq
    %v138 = vshrl.u32 %v137, 7
    %v139 = vsub.s32 0, %v138
    %v140 = vrot.slane %v43, %v139
    %v141 = vadd.f32 %v135, %v140
    %v142 = vadd.f32 %v136, %v140
    %v143 = vmax.f32 %v141, 0.0
    %v144 = vmax.f32 %v142, 0.0
    %v145 = vmul.f32 %v105, %v134
    %v146 = vmul.f32 %v106, %v134
    %v147 = vadd.f32 %v145, %v140
    %v148 = vadd.f32 %v146, %v140
    %v149 = vmax.f32 %v147, 0.0
    %v150 = vmax.f32 %v148, 0.0
    %v151 = vmax.f32 %v143, %v149
    %v152 = vmax.f32 %v144, %v150
    %vm153 = vcmask 261120
    %154 = vst.msk [vmem:[#allocation2] sm:$0xff] %vm153, %v151
    %vm155 = vcmask 259072
    %156 = vst.msk [vmem:[#allocation2 + $0x8] sm:$0x3f] %vm155, %v152
    %v157 = vmul.f32 %v123, %v134
    %v158 = vmul.f32 %v124, %v134
    %v159 = vadd.f32 %v157, %v140
    %v160 = vadd.f32 %v158, %v140
    %v161 = vmax.f32 %v159, 0.0
    %v162 = vmax.f32 %v160, 0.0
    %v163 = vmul.f32 %v129, %v134
    %v164 = vmul.f32 %v130, %v134
    %v165 = vadd.f32 %v163, %v140
    %v166 = vadd.f32 %v164, %v140
    %v167 = vmax.f32 %v165, 0.0
    %v168 = vmax.f32 %v166, 0.0
    %v169 = vmax.f32 %v161, %v167
    %v170 = vmax.f32 %v162, %v168
    %173 = vrot.lane.b32.xlu0 %v169, 32
    %v174 = vpop.permute.xlu0 %173
    %175 = vrot.lane.b32.xlu0 %v170, 32
    %v176 = vpop.permute.xlu0 %175
    %vm179 = vcmask 523520
    %180 = vst.msk [vmem:[#allocation2] sm:$0xff] %vm179, %v174
    %vm181 = vcmask 521472
    %182 = vst.msk [vmem:[#allocation2 + $0x8] sm:$0x3f] %vm181, %v176
    %v183 = vld [vmem:[#allocation2] sm:$0xff]
    %v184 = vld [vmem:[#allocation2 + $0x8] sm:$0x3f]
    %v185 = vld [vmem:[%s2] sm:$0xff]
    %v186 = vld [vmem:[%s2 + $0x8] sm:$0xff]
    %v187 = vld [vmem:[%s2 + $0x10] sm:$0xff]
    %v188 = vld [vmem:[%s2 + $0x18] sm:$0xff]
    %v189 = vld [vmem:[%s2 + $0x20] sm:$0xff]
    %v190 = vld [vmem:[%s2 + $0x28] sm:$0xff]
    %v191 = vld [vmem:[%s2 + $0x30] sm:$0xff]
    %v192 = vld [vmem:[%s2 + $0x38] sm:$0xff]
    %v194 = vsel %vm40, %v183, 0
    %v197 = vsel %vm40, %v184, 0
    %199 = vmatprep.subr.mxu0 0.0
    %200 = vmatpush1.msra.mxu0 %v185
    %201 = vmatprep.subr.mxu0 0.0
    %202 = vmatpush1.msra.mxu0 %v186
    %203 = vmatprep.subr.mxu0 0.0
    %204 = vmatpush1.msra.mxu0 %v187
    %205 = vmatprep.subr.mxu0 0.0
    %206 = vmatpush1.msra.mxu0 %v188
    %207 = vmatprep.subr.mxu0 0.0
    %208 = vmatpush1.msra.mxu0 %v189
    %209 = vmatprep.subr.mxu0 0.0
    %210 = vmatpush1.msra.mxu0 %v190
    %211 = vmatprep.subr.mxu0 0.0
    %212 = vmatpush1.msra.mxu0 %v191
    %213 = vmatprep.subr.mxu0 0.0
    %214 = vmatpush1.msra.mxu0 %v192
    %215 = vmatprep.subr.mxu0 0.0
    %216 = vmatpush1.msra.mxu0 0.0
    %217 = vmatprep.subr.mxu0 0.0
    %218 = vmatpush1.msra.mxu0 0.0
    %219 = vmatprep.subr.mxu0 0.0
    %220 = vmatpush1.msra.mxu0 0.0
    %221 = vmatprep.subr.mxu0 0.0
    %222 = vmatpush1.msra.mxu0 0.0
    %223 = vmatprep.subr.mxu0 0.0
    %224 = vmatpush1.msra.mxu0 0.0
    %225 = vmatprep.subr.mxu0 0.0
    %226 = vmatpush1.msra.mxu0 0.0
    %227 = vmatprep.subr.mxu0 0.0
    %228 = vmatpush1.msra.mxu0 0.0
    %229 = vmatprep.subr.mxu0 0.0
    %230 = vmatpush1.msra.mxu0 0.0
    %231 = vmatprep.subr.mxu0 0.0
    %232 = vmatpush1.msra.mxu0 0.0
    %233 = vmatprep.subr.mxu0 0.0
    %234 = vmatpush1.msra.mxu0 0.0
    %235 = vmatprep.subr.mxu0 0.0
    %236 = vmatpush1.msra.mxu0 0.0
    %237 = vmatprep.subr.mxu0 0.0
    %238 = vmatpush1.msra.mxu0 0.0
    %239 = vmatprep.subr.mxu0 0.0
    %240 = vmatpush1.msra.mxu0 0.0
    %241 = vmatprep.subr.mxu0 0.0
    %242 = vmatpush1.msra.mxu0 0.0
    %243 = vmatprep.subr.mxu0 0.0
    %244 = vmatpush1.msra.mxu0 0.0
    %245 = vmatprep.subr.mxu0 0.0
    %246 = vmatpush1.msra.mxu0 0.0
    %247 = vmatprep.subr.mxu0 0.0
    %248 = vmatpush1.msra.mxu0 0.0
    %249 = vmatprep.subr.mxu0 0.0
    %250 = vmatpush1.msra.mxu0 0.0
    %251 = vmatprep.subr.mxu0 0.0
    %252 = vmatpush1.msra.mxu0 0.0
    %253 = vmatprep.subr.mxu0 0.0
    %254 = vmatpush1.msra.mxu0 0.0
    %255 = vmatprep.subr.mxu0 0.0
    %256 = vmatpush1.msra.mxu0 0.0
    %257 = vmatprep.subr.mxu0 0.0
    %258 = vmatpush1.msra.mxu0 0.0
    %259 = vmatprep.subr.mxu0 0.0
    %260 = vmatpush1.msra.mxu0 0.0
    %261 = vmatprep.subr.mxu0 0.0
    %262 = vmatpush1.msra.mxu0 0.0
    %263 = vmatprep.mubr.f32.mxu0 0.0
    %264 = vmatmul.mubr.f32.gmra.mrb[0].mxu0 %v194
    %v265 = vpop.f32.mrb[0].mxu0
    %v266 = vadd.f32 0.0, %v265
    %v267 = vpop.f32.mrb[0].mxu0
    %268 = vmatprep.mubr.f32.mxu0 0.0
    %269 = vmatmul.mubr.f32.gmra.mrb[0].mxu0 %v197
    %v270 = vpop.f32.mrb[0].mxu0
    %v271 = vadd.f32 0.0, %v270
    %v272 = vpop.f32.mrb[0].mxu0
    %273 = vdwg.mxu0
    %v274 = vlaneseq
    %v275 = vshrl.u32 %v274, 7
    %v276 = vsub.s32 0, %v275
    %v277 = vrot.slane %v44, %v276
    %v278 = vmul.f32 %v266, %v277
    %v279 = vmul.f32 %v271, %v277
    %v280 = vlaneseq
    %v281 = vshrl.u32 %v280, 7
    %v282 = vsub.s32 0, %v281
    %v283 = vrot.slane %v45, %v282
    %v284 = vadd.f32 %v278, %v283
    %v285 = vadd.f32 %v279, %v283
    %v286 = vmax.f32 %v284, 0.0
    %v287 = vmax.f32 %v285, 0.0
    %290 = vrot.lane.b32.xlu0 %v286, 64
    %v291 = vpop.permute.xlu0 %290
    %292 = vrot.lane.b32.xlu0 %v287, 64
    %v293 = vpop.permute.xlu0 %292
    %v296 = vmax.f32 %v286, %v291
    %v297 = vmax.f32 %v287, %v293
    %298 = vst.msk [vmem:[#allocation2] sm:$0xff] %vm40, %v296
    %vm299 = vcmask 521216
    %300 = vst.msk [vmem:[#allocation2 + $0x8] sm:$0x3f] %vm299, %v297
    %v301 = vld [vmem:[#allocation2] sm:$0x3]
    %vm302 = vcmask 517120
    %303 = vst.msk [vmem:[#allocation3] sm:$0x3] %vm302, %v301
    %v304 = vld [vmem:[#allocation2 + $0x2] sm:$0x3]
    %306 = vrot.lane.b32.xlu0 %v304, 64
    %v307 = vpop.permute.xlu0 %306
    %vm309 = vcmask 1041920
    %310 = vst.msk [vmem:[#allocation3] sm:$0x3] %vm309, %v307
    %v311 = vld [vmem:[#allocation2 + $0x4] sm:$0x3]
    %312 = vst.msk [vmem:[#allocation3 + $0x8] sm:$0x3] %vm302, %v311
    %v313 = vld [vmem:[#allocation2 + $0x6] sm:$0x3]
    %315 = vrot.lane.b32.xlu0 %v313, 64
    %v316 = vpop.permute.xlu0 %315
    %318 = vst.msk [vmem:[#allocation3 + $0x8] sm:$0x3] %vm309, %v316
    %v319 = vld [vmem:[#allocation2 + $0x8] sm:$0x3]
    %320 = vst.msk [vmem:[#allocation3 + $0x10] sm:$0x3] %vm302, %v319
    %v321 = vld [vmem:[#allocation2 + $0xa] sm:$0x3]
    %323 = vrot.lane.b32.xlu0 %v321, 64
    %v324 = vpop.permute.xlu0 %323
    %326 = vst.msk [vmem:[#allocation3 + $0x10] sm:$0x3] %vm309, %v324
    %v327 = vld [vmem:[#allocation2 + $0xc] sm:$0x3]
    %328 = vst.msk [vmem:[#allocation3 + $0x18] sm:$0x3] %vm302, %v327
    %v329 = vld [vmem:[#allocation3] sm:$0xff]
    %v330 = vld [vmem:[#allocation3 + $0x8] sm:$0xff]
    %v331 = vld [vmem:[#allocation3 + $0x10] sm:$0xff]
    %v332 = vld [vmem:[#allocation3 + $0x18] sm:$0xff]
    %v333 = vld [vmem:[#allocation4] sm:$0xff]
    %v334 = vld [vmem:[#allocation4 + $0x8] sm:$0xff]
    %v335 = vld [vmem:[#allocation4 + $0x10] sm:$0xff]
    %v336 = vld [vmem:[#allocation4 + $0x18] sm:$0xff]
    %v337 = vld [vmem:[#allocation4 + $0x20] sm:$0xff]
    %v338 = vld [vmem:[#allocation4 + $0x28] sm:$0xff]
    %v339 = vld [vmem:[#allocation4 + $0x30] sm:$0xff]
    %v340 = vld [vmem:[#allocation4 + $0x38] sm:$0xff]
    %v341 = vld [vmem:[#allocation4 + $0x40] sm:$0xff]
    %v342 = vld [vmem:[#allocation4 + $0x48] sm:$0xff]
    %v343 = vld [vmem:[#allocation4 + $0x50] sm:$0xff]
    %v344 = vld [vmem:[#allocation4 + $0x58] sm:$0xff]
    %v345 = vld [vmem:[#allocation4 + $0x60] sm:$0xff]
    %v346 = vld [vmem:[#allocation4 + $0x68] sm:$0xff]
    %v347 = vld [vmem:[#allocation4 + $0x70] sm:$0xff]
    %v348 = vld [vmem:[#allocation4 + $0x78] sm:$0xff]
    %v349 = vld [vmem:[#allocation4 + $0x80] sm:$0xff]
    %v350 = vld [vmem:[#allocation4 + $0x88] sm:$0xff]
    %v351 = vld [vmem:[#allocation4 + $0x90] sm:$0xff]
    %v352 = vld [vmem:[#allocation4 + $0x98] sm:$0xff]
    %v353 = vld [vmem:[#allocation4 + $0xa0] sm:$0xff]
    %v354 = vld [vmem:[#allocation4 + $0xa8] sm:$0xff]
    %v355 = vld [vmem:[#allocation4 + $0xb0] sm:$0xff]
    %v356 = vld [vmem:[#allocation4 + $0xb8] sm:$0xff]
    %v357 = vld [vmem:[#allocation4 + $0xc0] sm:$0xff]
    %v358 = vld [vmem:[#allocation4 + $0xc8] sm:$0xff]
    %v359 = vld [vmem:[#allocation4 + $0xd0] sm:$0xff]
    %v360 = vld [vmem:[#allocation4 + $0xd8] sm:$0xff]
    %v361 = vld [vmem:[#allocation4 + $0xe0] sm:$0xff]
    %v362 = vld [vmem:[#allocation4 + $0xe8] sm:$0xff]
    %v363 = vld [vmem:[#allocation4 + $0xf0] sm:$0xff]
    %v364 = vld [vmem:[#allocation4 + $0xf8] sm:$0xff]
    %v365 = vld [vmem:[#allocation4 + $0x100] sm:$0xff]
    %v366 = vld [vmem:[#allocation4 + $0x108] sm:$0xff]
    %v367 = vld [vmem:[#allocation4 + $0x110] sm:$0xff]
    %v368 = vld [vmem:[#allocation4 + $0x118] sm:$0xff]
    %v369 = vld [vmem:[#allocation4 + $0x120] sm:$0xff]
    %v370 = vld [vmem:[#allocation4 + $0x128] sm:$0xff]
    %v371 = vld [vmem:[#allocation4 + $0x130] sm:$0xff]
    %v372 = vld [vmem:[#allocation4 + $0x138] sm:$0xff]
    %v373 = vld [vmem:[#allocation4 + $0x140] sm:$0xff]
    %v374 = vld [vmem:[#allocation4 + $0x148] sm:$0xff]
    %v375 = vld [vmem:[#allocation4 + $0x150] sm:$0xff]
    %v376 = vld [vmem:[#allocation4 + $0x158] sm:$0xff]
    %v377 = vld [vmem:[#allocation4 + $0x160] sm:$0xff]
    %v378 = vld [vmem:[#allocation4 + $0x168] sm:$0xff]
    %v379 = vld [vmem:[#allocation4 + $0x170] sm:$0xff]
    %v380 = vld [vmem:[#allocation4 + $0x178] sm:$0xff]
    %v381 = vld [vmem:[#allocation4 + $0x180] sm:$0xff]
    %v382 = vld [vmem:[#allocation4 + $0x188] sm:$0xff]
    %v383 = vld [vmem:[#allocation4 + $0x190] sm:$0xff]
    %v384 = vld [vmem:[#allocation4 + $0x198] sm:$0xff]
    %v385 = vld [vmem:[#allocation4 + $0x1a0] sm:$0xff]
    %v386 = vld [vmem:[#allocation4 + $0x1a8] sm:$0xff]
    %v387 = vld [vmem:[#allocation4 + $0x1b0] sm:$0xff]
    %v388 = vld [vmem:[#allocation4 + $0x1b8] sm:$0xff]
    %v389 = vlaneseq
    %v390 = vshrl.u32 %v389, 7
    %v391 = vsub.s32 0, %v390
    %v392 = vrot.slane %v46, %v391
    %v394 = vsel %vm40, %v332, 0
    %396 = vmatprep.subr.mxu0 0.0
    %397 = vmatpush1.msra.mxu0 %v333
    %398 = vmatprep.subr.mxu0 0.0
    %399 = vmatpush1.msra.mxu0 %v334
    %400 = vmatprep.subr.mxu0 0.0
    %401 = vmatpush1.msra.mxu0 %v335
    %402 = vmatprep.subr.mxu0 0.0
    %403 = vmatpush1.msra.mxu0 %v336
    %404 = vmatprep.subr.mxu0 0.0
    %405 = vmatpush1.msra.mxu0 %v337
    %406 = vmatprep.subr.mxu0 0.0
    %407 = vmatpush1.msra.mxu0 %v338
    %408 = vmatprep.subr.mxu0 0.0
    %409 = vmatpush1.msra.mxu0 %v339
    %410 = vmatprep.subr.mxu0 0.0
    %411 = vmatpush1.msra.mxu0 %v340
    %412 = vmatprep.subr.mxu0 0.0
    %413 = vmatpush1.msra.mxu0 %v341
    %414 = vmatprep.subr.mxu0 0.0
    %415 = vmatpush1.msra.mxu0 %v342
    %416 = vmatprep.subr.mxu0 0.0
    %417 = vmatpush1.msra.mxu0 %v343
    %418 = vmatprep.subr.mxu0 0.0
    %419 = vmatpush1.msra.mxu0 %v344
    %420 = vmatprep.subr.mxu0 0.0
    %421 = vmatpush1.msra.mxu0 %v345
    %422 = vmatprep.subr.mxu0 0.0
    %423 = vmatpush1.msra.mxu0 %v346
    %424 = vmatprep.subr.mxu0 0.0
    %425 = vmatpush1.msra.mxu0 %v347
    %426 = vmatprep.subr.mxu0 0.0
    %427 = vmatpush1.msra.mxu0 %v348
    %428 = vmatprep.subr.mxu0 0.0
    %429 = vmatpush1.msra.mxu0 %v349
    %430 = vmatprep.subr.mxu0 0.0
    %431 = vmatpush1.msra.mxu0 %v350
    %432 = vmatprep.subr.mxu0 0.0
    %433 = vmatpush1.msra.mxu0 %v351
    %434 = vmatprep.subr.mxu0 0.0
    %435 = vmatpush1.msra.mxu0 %v352
    %436 = vmatprep.subr.mxu0 0.0
    %437 = vmatpush1.msra.mxu0 %v353
    %438 = vmatprep.subr.mxu0 0.0
    %439 = vmatpush1.msra.mxu0 %v354
    %440 = vmatprep.subr.mxu0 0.0
    %441 = vmatpush1.msra.mxu0 %v355
    %442 = vmatprep.subr.mxu0 0.0
    %443 = vmatpush1.msra.mxu0 %v356
    %444 = vmatprep.subr.mxu0 0.0
    %445 = vmatpush1.msra.mxu0 %v357
    %446 = vmatprep.subr.mxu0 0.0
    %447 = vmatpush1.msra.mxu0 %v358
    %448 = vmatprep.subr.mxu0 0.0
    %449 = vmatpush1.msra.mxu0 %v359
    %450 = vmatprep.subr.mxu0 0.0
    %451 = vmatpush1.msra.mxu0 %v360
    %452 = vmatprep.subr.mxu0 0.0
    %453 = vmatpush1.msra.mxu0 %v361
    %454 = vmatprep.subr.mxu0 0.0
    %455 = vmatpush1.msra.mxu0 %v362
    %456 = vmatprep.subr.mxu0 0.0
    %457 = vmatpush1.msra.mxu0 %v363
    %458 = vmatprep.subr.mxu0 0.0
    %459 = vmatpush1.msra.mxu0 %v364
    %460 = vmatprep.mubr.f32.mxu0 %v330
    %461 = vmatmul.mubr.f32.gmra.mrb[0].mxu0 %v329
    %v462 = vpop.f32.mrb[0].mxu0
    %v463 = vadd.f32 %v392, %v462
    %v464 = vpop.f32.mrb[0].mxu0
    %465 = vdwg.mxu0
    %466 = vmatprep.subr.mxu0 0.0
    %467 = vmatpush1.msra.mxu0 %v365
    %468 = vmatprep.subr.mxu0 0.0
    %469 = vmatpush1.msra.mxu0 %v366
    %470 = vmatprep.subr.mxu0 0.0
    %471 = vmatpush1.msra.mxu0 %v367
    %472 = vmatprep.subr.mxu0 0.0
    %473 = vmatpush1.msra.mxu0 %v368
    %474 = vmatprep.subr.mxu0 0.0
    %475 = vmatpush1.msra.mxu0 %v369
    %476 = vmatprep.subr.mxu0 0.0
    %477 = vmatpush1.msra.mxu0 %v370
    %478 = vmatprep.subr.mxu0 0.0
    %479 = vmatpush1.msra.mxu0 %v371
    %480 = vmatprep.subr.mxu0 0.0
    %481 = vmatpush1.msra.mxu0 %v372
    %482 = vmatprep.subr.mxu0 0.0
    %483 = vmatpush1.msra.mxu0 %v373
    %484 = vmatprep.subr.mxu0 0.0
    %485 = vmatpush1.msra.mxu0 %v374
    %486 = vmatprep.subr.mxu0 0.0
    %487 = vmatpush1.msra.mxu0 %v375
    %488 = vmatprep.subr.mxu0 0.0
    %489 = vmatpush1.msra.mxu0 %v376
    %490 = vmatprep.subr.mxu0 0.0
    %491 = vmatpush1.msra.mxu0 %v377
    %492 = vmatprep.subr.mxu0 0.0
    %493 = vmatpush1.msra.mxu0 %v378
    %494 = vmatprep.subr.mxu0 0.0
    %495 = vmatpush1.msra.mxu0 %v379
    %496 = vmatprep.subr.mxu0 0.0
    %497 = vmatpush1.msra.mxu0 %v380
    %498 = vmatprep.subr.mxu0 0.0
    %499 = vmatpush1.msra.mxu0 %v381
    %500 = vmatprep.subr.mxu0 0.0
    %501 = vmatpush1.msra.mxu0 %v382
    %502 = vmatprep.subr.mxu0 0.0
    %503 = vmatpush1.msra.mxu0 %v383
    %504 = vmatprep.subr.mxu0 0.0
    %505 = vmatpush1.msra.mxu0 %v384
    %506 = vmatprep.subr.mxu0 0.0
    %507 = vmatpush1.msra.mxu0 %v385
    %508 = vmatprep.subr.mxu0 0.0
    %509 = vmatpush1.msra.mxu0 %v386
    %510 = vmatprep.subr.mxu0 0.0
    %511 = vmatpush1.msra.mxu0 %v387
    %512 = vmatprep.subr.mxu0 0.0
    %513 = vmatpush1.msra.mxu0 %v388
    %514 = vmatprep.subr.mxu0 0.0
    %515 = vmatpush1.msra.mxu0 0.0
    %516 = vmatprep.subr.mxu0 0.0
    %517 = vmatpush1.msra.mxu0 0.0
    %518 = vmatprep.subr.mxu0 0.0
    %519 = vmatpush1.msra.mxu0 0.0
    %520 = vmatprep.subr.mxu0 0.0
    %521 = vmatpush1.msra.mxu0 0.0
    %522 = vmatprep.subr.mxu0 0.0
    %523 = vmatpush1.msra.mxu0 0.0
    %524 = vmatprep.subr.mxu0 0.0
    %525 = vmatpush1.msra.mxu0 0.0
    %526 = vmatprep.subr.mxu0 0.0
    %527 = vmatpush1.msra.mxu0 0.0
    %528 = vmatprep.subr.mxu0 0.0
    %529 = vmatpush1.msra.mxu0 0.0
    %530 = vmatprep.mubr.f32.mxu0 %v394
    %531 = vmatmul.mubr.f32.gmra.mrb[0].mxu0 %v331
    %v532 = vpop.f32.mrb[0].mxu0
    %v533 = vadd.f32 %v463, %v532
    %v534 = vpop.f32.mrb[0].mxu0
    %535 = vdwg.mxu0
    %v536 = vmax.f32 %v533, 0.0
    %v537 = vld [vmem:[%s5] sm:$0xff]
    %v538 = vld [vmem:[%s5 + $0x8] sm:$0xff]
    %v539 = vld [vmem:[%s5 + $0x10] sm:$0xff]
    %v540 = vld [vmem:[%s5 + $0x18] sm:$0xff]
    %v541 = vld [vmem:[%s5 + $0x20] sm:$0xff]
    %v542 = vld [vmem:[%s5 + $0x28] sm:$0xff]
    %v543 = vld [vmem:[%s5 + $0x30] sm:$0xff]
    %v544 = vld [vmem:[%s5 + $0x38] sm:$0xff]
    %v545 = vld [vmem:[%s5 + $0x40] sm:$0xff]
    %v546 = vld [vmem:[%s5 + $0x48] sm:$0xff]
    %v547 = vld [vmem:[%s5 + $0x50] sm:$0xff]
    %v548 = vld [vmem:[%s5 + $0x58] sm:$0xff]
    %v549 = vld [vmem:[%s5 + $0x60] sm:$0xff]
    %v550 = vld [vmem:[%s5 + $0x68] sm:$0xff]
    %v551 = vld [vmem:[%s5 + $0x70] sm:$0xff]
    %v552 = vlaneseq
    %v553 = vshrl.u32 %v552, 7
    %v554 = vsub.s32 0, %v553
    %v555 = vrot.slane %v47, %v554
    %vm556 = vcmask 982016
    %v558 = vsel %vm556, %v536, 0
    %560 = vmatprep.subr.mxu0 0.0
    %561 = vmatpush1.msra.mxu0 %v537
    %562 = vmatprep.subr.mxu0 0.0
    %563 = vmatpush1.msra.mxu0 %v538
    %564 = vmatprep.subr.mxu0 0.0
    %565 = vmatpush1.msra.mxu0 %v539
    %566 = vmatprep.subr.mxu0 0.0
    %567 = vmatpush1.msra.mxu0 %v540
    %568 = vmatprep.subr.mxu0 0.0
    %569 = vmatpush1.msra.mxu0 %v541
    %570 = vmatprep.subr.mxu0 0.0
    %571 = vmatpush1.msra.mxu0 %v542
    %572 = vmatprep.subr.mxu0 0.0
    %573 = vmatpush1.msra.mxu0 %v543
    %574 = vmatprep.subr.mxu0 0.0
    %575 = vmatpush1.msra.mxu0 %v544
    %576 = vmatprep.subr.mxu0 0.0
    %577 = vmatpush1.msra.mxu0 %v545
    %578 = vmatprep.subr.mxu0 0.0
    %579 = vmatpush1.msra.mxu0 %v546
    %580 = vmatprep.subr.mxu0 0.0
    %581 = vmatpush1.msra.mxu0 %v547
    %582 = vmatprep.subr.mxu0 0.0
    %583 = vmatpush1.msra.mxu0 %v548
    %584 = vmatprep.subr.mxu0 0.0
    %585 = vmatpush1.msra.mxu0 %v549
    %586 = vmatprep.subr.mxu0 0.0
    %587 = vmatpush1.msra.mxu0 %v550
    %588 = vmatprep.subr.mxu0 0.0
    %589 = vmatpush1.msra.mxu0 %v551
    %590 = vmatprep.subr.mxu0 0.0
    %591 = vmatpush1.msra.mxu0 0.0
    %592 = vmatprep.subr.mxu0 0.0
    %593 = vmatpush1.msra.mxu0 0.0
    %594 = vmatprep.subr.mxu0 0.0
    %595 = vmatpush1.msra.mxu0 0.0
    %596 = vmatprep.subr.mxu0 0.0
    %597 = vmatpush1.msra.mxu0 0.0
    %598 = vmatprep.subr.mxu0 0.0
    %599 = vmatpush1.msra.mxu0 0.0
    %600 = vmatprep.subr.mxu0 0.0
    %601 = vmatpush1.msra.mxu0 0.0
    %602 = vmatprep.subr.mxu0 0.0
    %603 = vmatpush1.msra.mxu0 0.0
    %604 = vmatprep.subr.mxu0 0.0
    %605 = vmatpush1.msra.mxu0 0.0
    %606 = vmatprep.subr.mxu0 0.0
    %607 = vmatpush1.msra.mxu0 0.0
    %608 = vmatprep.subr.mxu0 0.0
    %609 = vmatpush1.msra.mxu0 0.0
    %610 = vmatprep.subr.mxu0 0.0
    %611 = vmatpush1.msra.mxu0 0.0
    %612 = vmatprep.subr.mxu0 0.0
    %613 = vmatpush1.msra.mxu0 0.0
    %614 = vmatprep.subr.mxu0 0.0
    %615 = vmatpush1.msra.mxu0 0.0
    %616 = vmatprep.subr.mxu0 0.0
    %617 = vmatpush1.msra.mxu0 0.0
    %618 = vmatprep.subr.mxu0 0.0
    %619 = vmatpush1.msra.mxu0 0.0
    %620 = vmatprep.subr.mxu0 0.0
    %621 = vmatpush1.msra.mxu0 0.0
    %622 = vmatprep.subr.mxu0 0.0
    %623 = vmatpush1.msra.mxu0 0.0
    %624 = vmatprep.mubr.f32.mxu0 0.0
    %625 = vmatmul.mubr.f32.gmra.mrb[0].mxu0 %v558
    %v626 = vpop.f32.mrb[0].mxu0
    %v627 = vadd.f32 %v555, %v626
    %v628 = vpop.f32.mrb[0].mxu0
    %629 = vdwg.mxu0
    %v630 = vmax.f32 %v627, 0.0
    %v631 = vlaneseq
    %v632 = vshrl.u32 %v631, 7
    %v633 = vsub.s32 0, %v632
    %v634 = vrot.slane %v48, %v633
    %v635 = vmul.f32 %v630, %v634
    %vm636 = vcmask 687104
    %v637 = vsel %vm636, %v635, 0.0
    %638 = vadd.xlane.f32.xlu0 %v637
    %v639 = vpop.xlane.xlu0 %638
    %v640 = vlaneseq
    %v641 = vshrl.u32 %v640, 7
    %v642 = vsub.s32 0, %v641
    %v643 = vrot.slane %v49, %v642
    %v644 = vadd.f32 %v639, %v643
    %646 = vset.pattern.permute.xlu0 0
    %647 = vperm.xlu0 %646, %v644
    %v648 = vpop.permute.xlu0 %647
    %650 = vst [vmem:[%s6] sm:$0xff] %v648
    // Predicated region
    $region30: #{net_forward.1} parent=1 // pred_check
      _
    $region31: #{net_forward.1} parent=1 // pred_check_branch
      %652 = sbr.rel (0) target = $region33
    $region32: #{net_forward.1} parent=1 // pred_region
      _
    $region33: #{net_forward.1} parent=1 // pred_fallthru
      _
    // Predicated region
    $region34: #{net_forward.1} parent=1 // pred_check
      _
    $region35: #{net_forward.1} parent=1 // pred_check_branch
      %654 = sbr.rel (0) target = $region37
    $region36: #{net_forward.1} parent=1 // pred_region
      _
    $region37: #{net_forward.1} parent=1 // pred_fallthru
      _
    %655 = vsyncpa [#allocation5], 1

</llo_original>
